<compile_context>
chip_gen: v7x
topology: tpu7x:2x2x1
jax: 0.10.0
libtpu: 0.0.40
codegen_flags: <defaults>
</compile_context>

<pallas_src>
import jax
import jax.numpy as jnp
from jax import lax
from jax.experimental import pallas as pl
from jax.experimental.pallas import tpu as pltpu


def _round_up(x, m):
    return ((x + m - 1) // m) * m


# ----------------------------------------------------------------------------
# Plain-JAX glue: build normalized A_hat from the sparse COO input A
# (mirrors get_A_hat / normalize_adj semantics, densified).
# ----------------------------------------------------------------------------
def build_A_hat(A, n_node, L):
    """A: (B, 2, 3, max_nnz) float. Returns dense A_hat: (B, N, N) float32."""
    A_in = A[:, 0]                                  # (B, 3, max_nnz)
    vals = A_in[:, 0].astype(jnp.float32)           # edge values (0 for padding)
    rows = A_in[:, 1].astype(jnp.int32)
    cols_raw = A_in[:, 2].astype(jnp.int32)

    t = L - 1
    in_window = (cols_raw >= t * n_node) & (cols_raw < (t + 1) * n_node)
    cols = cols_raw % n_node
    v = vals * in_window.astype(jnp.float32)        # padded / other-time -> 0

    def per_batch(r, c, vv):
        dense = jnp.zeros((n_node, n_node), jnp.float32)
        return dense.at[r, c].add(vv)

    adj = jax.vmap(per_batch)(rows, cols, v)        # (B, N, N)
    adj = adj + jnp.eye(n_node, dtype=jnp.float32)[None]   # A + I
    deg = adj.sum(axis=2)                           # row degree, (B, N)
    d_is = deg ** -0.5
    A_hat = adj * d_is[:, :, None] * d_is[:, None, :]
    return A_hat


# ----------------------------------------------------------------------------
# Pallas kernel: one batch element per grid step (2-D refs, batch squeezed).
# ----------------------------------------------------------------------------
def gcn_kernel(a_ref, h_ref, wgt_ref, bg_ref, wot_ref, bo_ref, out_ref):
    a = a_ref[...]                                  # (Nr, Nc) bf16
    h = h_ref[...]                                  # (Nc, S)  bf16

    # AH = A_hat @ H   (bf16 MXU inputs, f32 accumulation)
    ah = jnp.dot(a, h, preferred_element_type=jnp.float32)          # (Nr, S) f32

    # AHW = gcn_weight(AH); weights arrive pre-transposed -> plain (M,K)@(K,N)
    # TODO(synk): reference casts AH to float64 (AH.double()); TPU stays f32/bf16.
    ahw = jnp.dot(ah.astype(jnp.bfloat16), wgt_ref[...],
                  preferred_element_type=jnp.float32) + bg_ref[...]

    # ReLU
    o = jnp.maximum(ahw, 0.0)                                        # (Nr, S) f32

    # cosine-similarity row normalization:
    #   o / max(||o||, 1e-8) == o * rsqrt(max(||o||^2, 1e-16))  (EUP rsqrt)
    sq = jnp.sum(o * o, axis=1, keepdims=True)                       # (Nr, 1)
    on = o * lax.rsqrt(jnp.maximum(sq, 1e-16))
    on_b = on.astype(jnp.bfloat16)

    # Factored output matmul:  (on @ on^T) @ Wo^T == on @ (on^T @ Wo^T)
    # tmp contracts the node-row dim (dim 0 of both) -> (S, Nc); padded rows of
    # Wo^T are zero so padded (bias-only) activation rows contribute nothing.
    tmp = lax.dot_general(on_b, wot_ref[...],
                          dimension_numbers=(((0,), (0,)), ((), ())),
                          preferred_element_type=jnp.float32)        # (S, Nc)
    logits = jnp.dot(on_b, tmp.astype(jnp.bfloat16),
                     preferred_element_type=jnp.float32) + bo_ref[...]

    # sigmoid: exp and reciprocal both on the EUP slot (no VPU divide)
    out_ref[...] = pl.reciprocal(1.0 + jnp.exp(-logits), approx=True)


def gcn_forward(A_hat, H, Wg, bg, Wo, bo):
    B, N, _ = A_hat.shape
    S = H.shape[-1]
    Nr = _round_up(N, 16)    # sublane pad (bf16 tile) -- matmul M dim
    Nc = _round_up(N, 128)   # lane pad -- A_hat cols / Wo^T cols / output cols

    # Zero-padding is exact: padded A_hat rows/cols are 0, padded Wo^T rows are
    # 0 (killing the bias-only padded activation rows inside tmp), and padded
    # output rows/cols are sliced off below.
    A_hat_p = jnp.pad(A_hat, ((0, 0), (0, Nr - N), (0, Nc - N)))
    H_p = jnp.pad(H, ((0, 0), (0, Nc - N), (0, 0)))
    WoT_p = jnp.pad(Wo.T, ((0, Nr - N), (0, Nc - N)))
    bo_p = jnp.pad(bo, ((0, 0), (0, Nc - N)))

    # Pre-transpose Linear weights once (PyTorch Linear is x @ W.T + b) and
    # cast the MXU operands to bf16 (f32 accumulation inside the kernel).
    A_hat_b = A_hat_p.astype(jnp.bfloat16)
    H_b = H_p.astype(jnp.bfloat16)
    WgT_b = Wg.T.astype(jnp.bfloat16)                # (S, S)
    WoT_b = WoT_p.astype(jnp.bfloat16)               # (Nr, Nc)

    out = pl.pallas_call(
        gcn_kernel,
        out_shape=jax.ShapeDtypeStruct((B, Nr, Nc), jnp.float32),
        grid=(B,),
        in_specs=[
            pl.BlockSpec((pl.Squeezed(), Nr, Nc), lambda b: (b, 0, 0)),  # A_hat[b]
            pl.BlockSpec((pl.Squeezed(), Nc, S), lambda b: (b, 0, 0)),   # H[b]
            pl.BlockSpec((S, S), lambda b: (0, 0)),                      # Wg^T
            pl.BlockSpec((1, S), lambda b: (0, 0)),                      # gcn bias
            pl.BlockSpec((Nr, Nc), lambda b: (0, 0)),                    # Wo^T (padded)
            pl.BlockSpec((1, Nc), lambda b: (0, 0)),                     # out bias
        ],
        out_specs=pl.BlockSpec((pl.Squeezed(), Nr, Nc), lambda b: (b, 0, 0)),
        compiler_params=pltpu.CompilerParams(
            dimension_semantics=("parallel",),       # B>=2 -> both v7x TCs
            vmem_limit_bytes=64 * 1024 * 1024),      # v5e default is only 16 MiB
    )(A_hat_b, H_b, WgT_b, bg, WoT_b, bo_p)

    return out[:, :N, :N]


# ----------------------------------------------------------------------------
# End-to-end forward matching GCN.forward
# ----------------------------------------------------------------------------
def gcn_module_forward(prop_state, annotation, A, params, n_node, L):
    del annotation  # unused in the reference forward pass
    A_hat = build_A_hat(A, n_node, L)                  # (B, N, N)
    H = prop_state[:, :, -1].astype(jnp.float32)       # (B, N, S)  (last time step)
    return gcn_forward(A_hat, H, params["Wg"], params["bg"],
                       params["Wo"], params["bo"])


# Pure-JAX reference (f32) for a tolerance check against the bf16-MXU kernel.
def gcn_reference(prop_state, A, params, n_node, L):
    A_hat = build_A_hat(A, n_node, L)
    H = prop_state[:, :, -1].astype(jnp.float32)
    AH = jnp.einsum('bij,bjs->bis', A_hat, H)
    AHW = AH @ params["Wg"].T + params["bg"]
    o = jnp.maximum(AHW, 0.0)
    nrm = jnp.sqrt(jnp.sum(o * o, axis=-1, keepdims=True))
    on = o / jnp.maximum(nrm, 1e-8)
    sim = jnp.einsum('bis,bjs->bij', on, on)
    logits = sim @ params["Wo"].T + params["bo"]
    return jax.nn.sigmoid(logits)


if __name__ == "__main__":
    # opt-equivalent small config
    batch_size = 2
    n_node = 8          # == all_node_num
    state_dim = 16
    annotation_dim = 16
    L = 3
    max_nnz = 32
    nnz = 20

    key = jax.random.PRNGKey(0)
    k1, k2, k3, k4, k5, k6 = jax.random.split(key, 6)

    # Parameters (deterministic): weights ~ N(0, 0.02), biases = 0
    Wg = 0.02 * jax.random.normal(k1, (state_dim, state_dim), jnp.float32)
    bg = jnp.zeros((1, state_dim), jnp.float32)
    Wo = 0.02 * jax.random.normal(k2, (n_node, n_node), jnp.float32)
    bo = jnp.zeros((1, n_node), jnp.float32)
    params = {"Wg": Wg, "bg": bg, "Wo": Wo, "bo": bo}

    # Inputs
    prop_state = jax.random.normal(k3, (batch_size, n_node, L, state_dim), jnp.float32)
    annotation = jax.random.normal(k4, (batch_size, n_node, L, annotation_dim), jnp.float32)

    # Synthetic sparse COO A: (B, 2, 3, max_nnz)
    #   row 0 = vals (1.0 for the first `nnz` entries, 0 padding)
    #   row 1 = source node index
    #   row 2 = time * n_node + target node index
    src = jax.random.randint(k5, (batch_size, max_nnz), 0, n_node)
    tgt = jax.random.randint(k6, (batch_size, max_nnz), 0, n_node)
    tme = jax.random.randint(jax.random.fold_in(key, 7), (batch_size, max_nnz), 0, L)
    vals = (jnp.arange(max_nnz)[None, :] < nnz).astype(jnp.float32)
    vals = jnp.broadcast_to(vals, (batch_size, max_nnz))
    col = (tme * n_node + tgt).astype(jnp.float32)
    A_in = jnp.stack([vals, src.astype(jnp.float32), col], axis=1)   # (B, 3, max_nnz)
    A = jnp.stack([A_in, jnp.zeros_like(A_in)], axis=1)              # (B, 2, 3, max_nnz)

    out = gcn_module_forward(prop_state, annotation, A, params, n_node, L)
    out = jax.block_until_ready(out)
    assert out.shape == (batch_size, n_node, n_node)

    # Tolerance check (bf16 MXU inputs + approx EUP reciprocal vs f32 reference).
    ref = jax.block_until_ready(gcn_reference(prop_state, A, params, n_node, L))
    max_err = float(jnp.max(jnp.abs(out - ref)))
    assert max_err < 2e-2, f"max abs error vs reference too large: {max_err}"

    print("KERNEL_OK")
</pallas_src>

<mosaic_0001>
module attributes {stable_mosaic.version = 11 : i64} {
  func.func @gcn_kernel(%arg0: i32, %arg1: memref<1x16x128xbf16, #tpu.memory_space<vmem>>, %arg2: memref<1x128x16xbf16, #tpu.memory_space<vmem>>, %arg3: memref<16x16xbf16, #tpu.memory_space<vmem>>, %arg4: memref<1x16xf32, #tpu.memory_space<vmem>>, %arg5: memref<16x128xbf16, #tpu.memory_space<vmem>>, %arg6: memref<1x128xf32, #tpu.memory_space<vmem>>, %arg7: memref<1x16x128xf32, #tpu.memory_space<vmem>>) attributes {dimension_semantics = [#tpu.dimension_semantics<parallel>], iteration_bounds = array<i64: 2>, scalar_prefetch = 0 : i64, scratch_operands = 0 : i64, tpu.core_type = #tpu.core_type<tc>, window_params = [{transform_indices = @transform_0, window_bounds = array<i64: 1, 16, 128>}, {transform_indices = @transform_1, window_bounds = array<i64: 1, 128, 16>}, {pipeline_mode = #tpu.pipeline_mode<synchronous>, transform_indices = @transform_2, window_bounds = array<i64: 16, 16>}, {pipeline_mode = #tpu.pipeline_mode<synchronous>, transform_indices = @transform_3, window_bounds = array<i64: 1, 16>}, {pipeline_mode = #tpu.pipeline_mode<synchronous>, transform_indices = @transform_4, window_bounds = array<i64: 16, 128>}, {pipeline_mode = #tpu.pipeline_mode<synchronous>, transform_indices = @transform_5, window_bounds = array<i64: 1, 128>}, {transform_indices = @transform_6, window_bounds = array<i64: 1, 16, 128>}]} {
    %c0 = arith.constant 0 : index
    %c0_0 = arith.constant 0 : index
    %c0_1 = arith.constant 0 : index
    %0 = vector.load %arg1[%c0, %c0_0, %c0_1] : memref<1x16x128xbf16, #tpu.memory_space<vmem>>, vector<1x16x128xbf16>
    %1 = vector.shape_cast %0 : vector<1x16x128xbf16> to vector<16x128xbf16>
    %c0_2 = arith.constant 0 : index
    %c0_3 = arith.constant 0 : index
    %c0_4 = arith.constant 0 : index
    %2 = vector.load %arg2[%c0_2, %c0_3, %c0_4] : memref<1x128x16xbf16, #tpu.memory_space<vmem>>, vector<1x128x16xbf16>
    %3 = vector.shape_cast %2 : vector<1x128x16xbf16> to vector<128x16xbf16>
    %cst = arith.constant dense<0.000000e+00> : vector<16x16xf32>
    %4 = tpu.matmul %1, %3, %cst {dimension_numbers = #tpu.dot_dimension_numbers<[1], [0], [0], [1], [0, 0, 1, 1], [], []>} : vector<16x128xbf16>, vector<128x16xbf16>, vector<16x16xf32> -> vector<16x16xf32>
    %5 = arith.truncf %4 : vector<16x16xf32> to vector<16x16xbf16>
    %c0_5 = arith.constant 0 : index
    %c0_6 = arith.constant 0 : index
    %6 = vector.load %arg3[%c0_5, %c0_6] : memref<16x16xbf16, #tpu.memory_space<vmem>>, vector<16x16xbf16>
    %cst_7 = arith.constant dense<0.000000e+00> : vector<16x16xf32>
    %7 = tpu.matmul %5, %6, %cst_7 {dimension_numbers = #tpu.dot_dimension_numbers<[1], [0], [0], [1], [0, 0, 1, 1], [], []>} : vector<16x16xbf16>, vector<16x16xbf16>, vector<16x16xf32> -> vector<16x16xf32>
    %c0_8 = arith.constant 0 : index
    %c0_9 = arith.constant 0 : index
    %8 = vector.load %arg4[%c0_8, %c0_9] : memref<1x16xf32, #tpu.memory_space<vmem>>, vector<1x16xf32>
    %9 = vector.broadcast %8 : vector<1x16xf32> to vector<16x16xf32>
    %10 = arith.addf %7, %9 : vector<16x16xf32>
    %cst_10 = arith.constant 0.000000e+00 : f32
    %11 = vector.broadcast %cst_10 : f32 to vector<16x16xf32>
    %12 = arith.maximumf %10, %11 : vector<16x16xf32>
    %13 = arith.mulf %12, %12 : vector<16x16xf32>
    %cst_11 = arith.constant dense<0.000000e+00> : vector<16xf32>
    %14 = vector.multi_reduction <add>, %13, %cst_11 [1] : vector<16x16xf32> to vector<16xf32>
    %15 = vector.shape_cast %14 : vector<16xf32> to vector<16x1xf32>
    %cst_12 = arith.constant 1.000000e-16 : f32
    %16 = vector.broadcast %cst_12 : f32 to vector<16x1xf32>
    %17 = arith.maximumf %15, %16 : vector<16x1xf32>
    %18 = math.rsqrt %17 : vector<16x1xf32>
    %19 = vector.broadcast %18 : vector<16x1xf32> to vector<16x16xf32>
    %20 = arith.mulf %12, %19 : vector<16x16xf32>
    %21 = arith.truncf %20 : vector<16x16xf32> to vector<16x16xbf16>
    %c0_13 = arith.constant 0 : index
    %c0_14 = arith.constant 0 : index
    %22 = vector.load %arg5[%c0_13, %c0_14] : memref<16x128xbf16, #tpu.memory_space<vmem>>, vector<16x128xbf16>
    %cst_15 = arith.constant dense<0.000000e+00> : vector<16x128xf32>
    %23 = tpu.matmul %21, %22, %cst_15 {dimension_numbers = #tpu.dot_dimension_numbers<[0], [0], [1], [1], [0, 1, 1, 1], [], []>} : vector<16x16xbf16>, vector<16x128xbf16>, vector<16x128xf32> -> vector<16x128xf32>
    %24 = arith.truncf %23 : vector<16x128xf32> to vector<16x128xbf16>
    %cst_16 = arith.constant dense<0.000000e+00> : vector<16x128xf32>
    %25 = tpu.matmul %21, %24, %cst_16 {dimension_numbers = #tpu.dot_dimension_numbers<[1], [0], [0], [1], [0, 0, 1, 1], [], []>} : vector<16x16xbf16>, vector<16x128xbf16>, vector<16x128xf32> -> vector<16x128xf32>
    %c0_17 = arith.constant 0 : index
    %c0_18 = arith.constant 0 : index
    %26 = vector.load %arg6[%c0_17, %c0_18] : memref<1x128xf32, #tpu.memory_space<vmem>>, vector<1x128xf32>
    %27 = vector.broadcast %26 : vector<1x128xf32> to vector<16x128xf32>
    %28 = arith.addf %25, %27 : vector<16x128xf32>
    %cst_19 = arith.constant 0.000000e+00 : f32
    %29 = vector.broadcast %cst_19 : f32 to vector<16x128xf32>
    %30 = arith.subf %29, %28 : vector<16x128xf32>
    %31 = math.exp %30 : vector<16x128xf32>
    %cst_20 = arith.constant 1.000000e+00 : f32
    %32 = vector.broadcast %cst_20 : f32 to vector<16x128xf32>
    %33 = arith.addf %32, %31 : vector<16x128xf32>
    %34 = tpu.reciprocal %33 {approx = true} : vector<16x128xf32> -> vector<16x128xf32>
    %c0_21 = arith.constant 0 : index
    %c0_22 = arith.constant 0 : index
    %c0_23 = arith.constant 0 : index
    %35 = vector.load %arg7[%c0_21, %c0_22, %c0_23] : memref<1x16x128xf32, #tpu.memory_space<vmem>>, vector<1x16x128xf32>
    %36 = vector.shape_cast %35 : vector<1x16x128xf32> to vector<16x128xf32>
    %37 = vector.shape_cast %34 : vector<16x128xf32> to vector<1x16x128xf32>
    tpu.vector_store %arg7[%c0_21, %c0_22, %c0_23], %37 {strides = array<i32>} : memref<1x16x128xf32, #tpu.memory_space<vmem>>, vector<1x16x128xf32>,
    return
  }
  func.func @transform_0(%arg0: i32) -> (i32, i32, i32) {
    %c0_i32 = arith.constant 0 : i32
    %c0_i32_0 = arith.constant 0 : i32
    %c0_i32_1 = arith.constant 0 : i32
    return %arg0, %c0_i32, %c0_i32_0 : i32, i32, i32
  }
  func.func @transform_1(%arg0: i32) -> (i32, i32, i32) {
    %c0_i32 = arith.constant 0 : i32
    %c0_i32_0 = arith.constant 0 : i32
    %c0_i32_1 = arith.constant 0 : i32
    return %arg0, %c0_i32, %c0_i32_0 : i32, i32, i32
  }
  func.func @transform_2(%arg0: i32) -> (i32, i32) {
    %c0_i32 = arith.constant 0 : i32
    %c0_i32_0 = arith.constant 0 : i32
    %c0_i32_1 = arith.constant 0 : i32
    return %c0_i32, %c0_i32_0 : i32, i32
  }
  func.func @transform_3(%arg0: i32) -> (i32, i32) {
    %c0_i32 = arith.constant 0 : i32
    %c0_i32_0 = arith.constant 0 : i32
    %c0_i32_1 = arith.constant 0 : i32
    return %c0_i32, %c0_i32_0 : i32, i32
  }
  func.func @transform_4(%arg0: i32) -> (i32, i32) {
    %c0_i32 = arith.constant 0 : i32
    %c0_i32_0 = arith.constant 0 : i32
    %c0_i32_1 = arith.constant 0 : i32
    return %c0_i32, %c0_i32_0 : i32, i32
  }
  func.func @transform_5(%arg0: i32) -> (i32, i32) {
    %c0_i32 = arith.constant 0 : i32
    %c0_i32_0 = arith.constant 0 : i32
    %c0_i32_1 = arith.constant 0 : i32
    return %c0_i32, %c0_i32_0 : i32, i32
  }
  func.func @transform_6(%arg0: i32) -> (i32, i32, i32) {
    %c0_i32 = arith.constant 0 : i32
    %c0_i32_0 = arith.constant 0 : i32
    %c0_i32_1 = arith.constant 0 : i32
    return %arg0, %c0_i32, %c0_i32_0 : i32, i32, i32
  }
}

</mosaic_0001>

<llo_original>
// kernel: tpu_custom_call.1
$region0: #{tpu_custom_call.1}
  #allocation0 [shape = 'u32[]', space=smem, size = 0x4, offset = 0x4, fixed_abs, tag = 'smem constant byte address 0x4 - core index']
  #allocation1 [shape = 'u32[144,128]{1,0:T(1,128)}', space=vmem, size = 0x12000, scoped, tag = 'internal scratch']
  %s0 = inlined_call_operand.hbm [shape: bf16[2,16,128], index: 0, kind: input, shape index: {}]
  %s1 = inlined_call_operand.hbm [shape: bf16[2,128,16], index: 1, kind: input, shape index: {}]
  %s2 = inlined_call_operand.hbm [shape: bf16[16,16], index: 2, kind: input, shape index: {}]
  %s3 = inlined_call_operand.hbm [shape: f32[1,16], index: 3, kind: input, shape index: {}]
  %s4 = inlined_call_operand.hbm [shape: bf16[16,128], index: 4, kind: input, shape index: {}]
  %s5 = inlined_call_operand.hbm [shape: f32[1,128], index: 5, kind: input, shape index: {}]
  %s6 = inlined_call_operand.hbm [shape: f32[2,16,128], index: 6, kind: output, shape index: {}]
  %s7 = sld [smem:[#allocation0]]
  $region81: #{tpu_custom_call.1} parent=0
    _
  %s9 = ssub.s32 1, %s7
  %s10 = scalar_select 0, %s9, %s7
  $region1: #{tpu_custom_call.1} parent=0
    #allocation2 [shape = 'u8[8192]{0}', space=vmem, size = 0x2000, scoped, tag = 'input window, operand 0']
    #allocation3 [shape = 's32[2]{0}', space=sflag, size = 0x8, scoped, tag = 'scoped memory for tpu_custom_call.1']
    #allocation4 [shape = 's32[2]{0}', space=sflag, size = 0x8, scoped, tag = 'scoped memory for tpu_custom_call.1']
    #allocation5 [shape = 'u8[65536]{0}', space=vmem, size = 0x10000, scoped, tag = 'input window, operand 1']
    #allocation6 [shape = 's32[2]{0}', space=sflag, size = 0x8, scoped, tag = 'scoped memory for tpu_custom_call.1']
    #allocation7 [shape = 'u8[4096]{0}', space=vmem, size = 0x1000, scoped, tag = 'input window, operand 2, single buffered']
    #allocation8 [shape = 'u8[512]{0}', space=vmem, size = 0x400, scoped, tag = 'input window, operand 3, single buffered']
    #allocation9 [shape = 's32[1]{0}', space=sflag, size = 0x4, scoped, tag = 'scoped memory for tpu_custom_call.1']
    #allocation10 [shape = 'u8[4096]{0}', space=vmem, size = 0x1000, scoped, tag = 'input window, operand 4, single buffered']
    #allocation11 [shape = 'u8[512]{0}', space=vmem, size = 0x400, scoped, tag = 'input window, operand 5, single buffered']
    #allocation12 [shape = 's32[1]{0}', space=sflag, size = 0x4, scoped, tag = 'scoped memory for tpu_custom_call.1']
    #allocation13 [shape = 'u8[16384]{0}', space=vmem, size = 0x4000, scoped, tag = 'output window, operand 0']
    %11 = vsyncpa [#allocation3], 0
    %s12 = scalar_lea.sflag [#allocation3], 1
    %13 = vsyncpa %s12, 0
    %14 = vsyncpa [#allocation6], 0
    %s15 = scalar_lea.sflag [#allocation6], 1
    %16 = vsyncpa %s15, 0
    %17 = vsyncpa [#allocation9], 0
    %18 = vsyncpa [#allocation12], 0
    %19 = vsyncpa [#allocation4], 0
    %s20 = scalar_lea.sflag [#allocation4], 1
    %21 = vsyncpa %s20, 0
    loop: start=0, step=1, limit=4
    $region2: #{tpu_custom_call.1} parent=1 // loop_pre_header
      _
    $region3: #{tpu_custom_call.1} parent=1 // loop_header
      %s23 = sphi 0, %s27
      %p24 = scmp.ge.s32.totalorder %s23, 4
      %s33 = sphi 0, %s35
      %s36 = sphi 0, %s33
      %s37 = sphi 0, %s36
      %s53 = sphi 0, %s37
      %s59 = sphi 0, %s61
      %s62 = sphi 0, %s59
      %s63 = sphi 0, %s62
      %s79 = sphi 0, %s63
      %s83 = sphi 0, %s83
      %s85 = sphi 0, %s83
      %s86 = sphi 0, %s85
      %s100 = sphi 0, %s86
      %s104 = sphi 0, %s104
      %s106 = sphi 0, %s104
      %s107 = sphi 0, %s106
      %s121 = sphi 0, %s107
      %s125 = sphi 0, %s125
      %s127 = sphi 0, %s125
      %s128 = sphi 0, %s127
      %s142 = sphi 0, %s128
      %s146 = sphi 0, %s146
      %s148 = sphi 0, %s146
      %s149 = sphi 0, %s148
      %s163 = sphi 0, %s149
      %s169 = sphi 0, %s171
      %s172 = sphi 0, %s169
      %s173 = sphi 0, %s172
      %s189 = sphi 0, %s173
    $region4: #{tpu_custom_call.1} parent=1 // loop_header_branch
      %26 = sbr.rel (%p24) target = $region8
    $region5: #{tpu_custom_call.1} parent=1 // loop_body
      %s28 = ssub.s32 %s23, 1
      %s29 = ssub.s32 %s23, 2
      %s30 = sadd.s32 %s23, 1
      %s31 = ssub.s32 %s23, %s30
      %p32 = scmp.eq.s32.totalorder %s31, 0
      %s34 = sadd.s32 %s33, 1
      %s35 = scalar_select %p32, %s33, %s34
      %p38 = pneg %p32
      %p39 = scmp.eq.s32.totalorder %s23, 1
      %p40 = por %p38, %p39
      %p41 = scmp.ne.s32.totalorder %s33, %s36
      %p42 = scmp.eq.s32.totalorder %s23, 0
      %p43 = por %p41, %p42
      %p44 = scmp.ne.s32.totalorder %s33, %s36
      %p45 = scmp.eq.s32.totalorder %s28, 1
      %p46 = por %p44, %p45
      %p47 = scmp.ne.s32.totalorder %s36, %s37
      %p48 = scmp.eq.s32.totalorder %s28, 0
      %p49 = por %p47, %p48
      %p50 = scmp.ne.s32.totalorder %s36, %s37
      %p51 = scmp.eq.s32.totalorder %s29, 1
      %p52 = por %p50, %p51
      %p54 = scmp.ne.s32.totalorder %s37, %s53
      %p55 = scmp.eq.s32.totalorder %s29, 0
      %p56 = por %p54, %p55
      %s57 = ssub.s32 %s23, %s30
      %p58 = scmp.eq.s32.totalorder %s57, 0
      %s60 = sadd.s32 %s59, 1
      %s61 = scalar_select %p58, %s59, %s60
      %p64 = pneg %p58
      %p65 = scmp.eq.s32.totalorder %s23, 1
      %p66 = por %p64, %p65
      %p67 = scmp.ne.s32.totalorder %s59, %s62
      %p68 = scmp.eq.s32.totalorder %s23, 0
      %p69 = por %p67, %p68
      %p70 = scmp.ne.s32.totalorder %s59, %s62
      %p71 = scmp.eq.s32.totalorder %s28, 1
      %p72 = por %p70, %p71
      %p73 = scmp.ne.s32.totalorder %s62, %s63
      %p74 = scmp.eq.s32.totalorder %s28, 0
      %p75 = por %p73, %p74
      %p76 = scmp.ne.s32.totalorder %s62, %s63
      %p77 = scmp.eq.s32.totalorder %s29, 1
      %p78 = por %p76, %p77
      %p80 = scmp.ne.s32.totalorder %s63, %s79
      %p81 = scmp.eq.s32.totalorder %s29, 0
      %p82 = por %p80, %p81
      %s84 = sadd.s32 %s83, 1
      %p87 = scmp.eq.s32.totalorder %s23, 1
      %p88 = scmp.ne.s32.totalorder %s83, %s85
      %p89 = scmp.eq.s32.totalorder %s23, 0
      %p90 = por %p88, %p89
      %p91 = scmp.ne.s32.totalorder %s83, %s85
      %p92 = scmp.eq.s32.totalorder %s28, 1
      %p93 = por %p91, %p92
      %p94 = scmp.ne.s32.totalorder %s85, %s86
      %p95 = scmp.eq.s32.totalorder %s28, 0
      %p96 = por %p94, %p95
      %p97 = scmp.ne.s32.totalorder %s85, %s86
      %p98 = scmp.eq.s32.totalorder %s29, 1
      %p99 = por %p97, %p98
      %p101 = scmp.ne.s32.totalorder %s86, %s100
      %p102 = scmp.eq.s32.totalorder %s29, 0
      %p103 = por %p101, %p102
      %s105 = sadd.s32 %s104, 1
      %p108 = scmp.eq.s32.totalorder %s23, 1
      %p109 = scmp.ne.s32.totalorder %s104, %s106
      %p110 = scmp.eq.s32.totalorder %s23, 0
      %p111 = por %p109, %p110
      %p112 = scmp.ne.s32.totalorder %s104, %s106
      %p113 = scmp.eq.s32.totalorder %s28, 1
      %p114 = por %p112, %p113
      %p115 = scmp.ne.s32.totalorder %s106, %s107
      %p116 = scmp.eq.s32.totalorder %s28, 0
      %p117 = por %p115, %p116
      %p118 = scmp.ne.s32.totalorder %s106, %s107
      %p119 = scmp.eq.s32.totalorder %s29, 1
      %p120 = por %p118, %p119
      %p122 = scmp.ne.s32.totalorder %s107, %s121
      %p123 = scmp.eq.s32.totalorder %s29, 0
      %p124 = por %p122, %p123
      %s126 = sadd.s32 %s125, 1
      %p129 = scmp.eq.s32.totalorder %s23, 1
      %p130 = scmp.ne.s32.totalorder %s125, %s127
      %p131 = scmp.eq.s32.totalorder %s23, 0
      %p132 = por %p130, %p131
      %p133 = scmp.ne.s32.totalorder %s125, %s127
      %p134 = scmp.eq.s32.totalorder %s28, 1
      %p135 = por %p133, %p134
      %p136 = scmp.ne.s32.totalorder %s127, %s128
      %p137 = scmp.eq.s32.totalorder %s28, 0
      %p138 = por %p136, %p137
      %p139 = scmp.ne.s32.totalorder %s127, %s128
      %p140 = scmp.eq.s32.totalorder %s29, 1
      %p141 = por %p139, %p140
      %p143 = scmp.ne.s32.totalorder %s128, %s142
      %p144 = scmp.eq.s32.totalorder %s29, 0
      %p145 = por %p143, %p144
      %s147 = sadd.s32 %s146, 1
      %p150 = scmp.eq.s32.totalorder %s23, 1
      %p151 = scmp.ne.s32.totalorder %s146, %s148
      %p152 = scmp.eq.s32.totalorder %s23, 0
      %p153 = por %p151, %p152
      %p154 = scmp.ne.s32.totalorder %s146, %s148
      %p155 = scmp.eq.s32.totalorder %s28, 1
      %p156 = por %p154, %p155
      %p157 = scmp.ne.s32.totalorder %s148, %s149
      %p158 = scmp.eq.s32.totalorder %s28, 0
      %p159 = por %p157, %p158
      %p160 = scmp.ne.s32.totalorder %s148, %s149
      %p161 = scmp.eq.s32.totalorder %s29, 1
      %p162 = por %p160, %p161
      %p164 = scmp.ne.s32.totalorder %s149, %s163
      %p165 = scmp.eq.s32.totalorder %s29, 0
      %p166 = por %p164, %p165
      %s167 = ssub.s32 %s23, %s30
      %p168 = scmp.eq.s32.totalorder %s167, 0
      %s170 = sadd.s32 %s169, 1
      %s171 = scalar_select %p168, %s169, %s170
      %p174 = pneg %p168
      %p175 = scmp.eq.s32.totalorder %s23, 1
      %p176 = por %p174, %p175
      %p177 = scmp.ne.s32.totalorder %s169, %s172
      %p178 = scmp.eq.s32.totalorder %s23, 0
      %p179 = por %p177, %p178
      %p180 = scmp.ne.s32.totalorder %s169, %s172
      %p181 = scmp.eq.s32.totalorder %s28, 1
      %p182 = por %p180, %p181
      %p183 = scmp.ne.s32.totalorder %s172, %s173
      %p184 = scmp.eq.s32.totalorder %s28, 0
      %p185 = por %p183, %p184
      %p186 = scmp.ne.s32.totalorder %s172, %s173
      %p187 = scmp.eq.s32.totalorder %s29, 1
      %p188 = por %p186, %p187
      %p190 = scmp.ne.s32.totalorder %s173, %s189
      %p191 = scmp.eq.s32.totalorder %s29, 0
      %p192 = por %p190, %p191
      %p193 = scmp.le.s32.totalorder 1, %s23
      %p194 = scmp.lt.s32.totalorder %s23, 3
      %p195 = pnand %p193, %p194
      %p196 = pneg %p195
      // Predicated region
      $region9: #{tpu_custom_call.1} parent=5 // pred_check
        _
      $region10: #{tpu_custom_call.1} parent=5 // pred_check_branch
        %198 = sbr.rel (%p195) target = $region12
      $region11: #{tpu_custom_call.1} parent=5 // pred_region
        %s199 = ssub.s32 %s23, 1
        // Predicated region
        $region13: #{tpu_custom_call.1} parent=11 // pred_check
          %p200 = pneg %p96
        $region14: #{tpu_custom_call.1} parent=11 // pred_check_branch
          %202 = sbr.rel (%p200) target = $region16
        $region15: #{tpu_custom_call.1} parent=11 // pred_region
          %s204 = ssub.s32 128, 128
          %205 = vsyncadd [#allocation6], %s204
          %s206 = sshll.u32 [#allocation7], 4
          %s207 = int_to_ptr.vmem [resolvable:$true] %s206
          %212 = dma.hbm_to_vmem [thread:$0]  %s2, 128, %s207, [#allocation6], 64, 64, 4
        $region16: #{tpu_custom_call.1} parent=11 // pred_fallthru
          _
        // Predicated region
        $region17: #{tpu_custom_call.1} parent=11 // pred_check
          %p213 = pneg %p117
        $region18: #{tpu_custom_call.1} parent=11 // pred_check_branch
          %215 = sbr.rel (%p213) target = $region20
        $region19: #{tpu_custom_call.1} parent=11 // pred_region
          %s217 = ssub.s32 16, 16
          %218 = vsyncadd [#allocation9], %s217
          %s220 = sshll.u32 [#allocation8], 4
          %s221 = int_to_ptr.vmem [resolvable:$true] %s220
          %223 = dma.hbm_to_vmem [thread:$0]  %s3, 16, %s221, [#allocation9]
        $region20: #{tpu_custom_call.1} parent=11 // pred_fallthru
          _
        // Predicated region
        $region21: #{tpu_custom_call.1} parent=11 // pred_check
          %p224 = pneg %p138
        $region22: #{tpu_custom_call.1} parent=11 // pred_check_branch
          %226 = sbr.rel (%p224) target = $region24
        $region23: #{tpu_custom_call.1} parent=11 // pred_region
          %s228 = ssub.s32 128, 128
          %229 = vsyncadd [#allocation9], %s228
          %s230 = sshll.u32 [#allocation10], 4
          %s231 = int_to_ptr.vmem [resolvable:$true] %s230
          %236 = dma.hbm_to_vmem [thread:$0]  %s4, 128, %s231, [#allocation9], 64, 64, 4
        $region24: #{tpu_custom_call.1} parent=11 // pred_fallthru
          _
        // Predicated region
        $region25: #{tpu_custom_call.1} parent=11 // pred_check
          %p237 = pneg %p159
        $region26: #{tpu_custom_call.1} parent=11 // pred_check_branch
          %239 = sbr.rel (%p237) target = $region28
        $region27: #{tpu_custom_call.1} parent=11 // pred_region
          %s241 = ssub.s32 16, 16
          %242 = vsyncadd [#allocation12], %s241
          %s244 = sshll.u32 [#allocation11], 4
          %s245 = int_to_ptr.vmem [resolvable:$true] %s244
          %247 = dma.hbm_to_vmem [thread:$0]  %s5, 16, %s245, [#allocation12]
        $region28: #{tpu_custom_call.1} parent=11 // pred_fallthru
          _
      $region12: #{tpu_custom_call.1} parent=5 // pred_fallthru
        _
      %p248 = scmp.lt.s32.totalorder %s23, 2
      // Predicated region
      $region29: #{tpu_custom_call.1} parent=5 // pred_check
        %p249 = pneg %p248
      $region30: #{tpu_custom_call.1} parent=5 // pred_check_branch
        %251 = sbr.rel (%p249) target = $region32
      $region31: #{tpu_custom_call.1} parent=5 // pred_region
        // Predicated region
        $region33: #{tpu_custom_call.1} parent=31 // pred_check
          %p252 = pneg %p43
        $region34: #{tpu_custom_call.1} parent=31 // pred_check_branch
          %254 = sbr.rel (%p252) target = $region36
        $region35: #{tpu_custom_call.1} parent=31 // pred_region
          %s255 = sand.u32 %s33, 1
          %s256 = scalar_lea.sflag [#allocation3], %s255
          %s257 = sand.u32 %s33, 1
          %s258 = smul.addr %s257, 8
          %s259 = scalar_lea.vmem [#allocation2], %s258
          %s261 = ssub.s32 128, 128
          %262 = vsyncadd %s256, %s261
          %s263 = smul.addr %s23, 2
          %s264 = smul.addr %s263, 64
          %s265 = scalar_lea.hbm %s0, %s264
          %s266 = sshll.u32 %s259, 4
          %s267 = int_to_ptr.vmem [resolvable:$true] %s266
          %272 = dma.hbm_to_vmem [thread:$0]  %s265, 128, %s267, %s256, 64, 64, 4
        $region36: #{tpu_custom_call.1} parent=31 // pred_fallthru
          _
        // Predicated region
        $region37: #{tpu_custom_call.1} parent=31 // pred_check
          %p273 = pneg %p69
        $region38: #{tpu_custom_call.1} parent=31 // pred_check_branch
          %275 = sbr.rel (%p273) target = $region40
        $region39: #{tpu_custom_call.1} parent=31 // pred_region
          %s276 = sand.u32 %s23, 1
          %s277 = scalar_lea.sflag [#allocation6], %s276
          %s278 = sand.u32 %s59, 1
          %s279 = smul.addr %s278, 64
          %s280 = scalar_lea.vmem [#allocation5], %s279
          %s282 = ssub.s32 1024, 1024
          %283 = vsyncadd %s277, %s282
          %s284 = smul.addr %s23, 16
          %s285 = smul.addr %s284, 64
          %s286 = scalar_lea.hbm %s1, %s285
          %s287 = sshll.u32 %s280, 4
          %s288 = int_to_ptr.vmem [resolvable:$true] %s287
          %293 = dma.hbm_to_vmem [thread:$0]  %s286, 1024, %s288, %s277, 64, 64, 4
        $region40: #{tpu_custom_call.1} parent=31 // pred_fallthru
          _
      $region32: #{tpu_custom_call.1} parent=5 // pred_fallthru
        _
      %p294 = scmp.le.s32.totalorder 1, %s23
      %p295 = scmp.lt.s32.totalorder %s23, 3
      %p296 = pnand %p294, %p295
      %p297 = pneg %p296
      // Predicated region
      $region41: #{tpu_custom_call.1} parent=5 // pred_check
        _
      $region42: #{tpu_custom_call.1} parent=5 // pred_check_branch
        %299 = sbr.rel (%p296) target = $region44
      $region43: #{tpu_custom_call.1} parent=5 // pred_region
        %s300 = ssub.s32 %s23, 1
        %s301 = sand.u32 %s36, 1
        %s302 = scalar_lea.sflag [#allocation3], %s301
        %s303 = sand.u32 %s36, 1
        %s304 = smul.addr %s303, 8
        %s305 = scalar_lea.vmem [#allocation2], %s304
        // Predicated region
        $region45: #{tpu_custom_call.1} parent=43 // pred_check
          %p306 = pneg %p49
        $region46: #{tpu_custom_call.1} parent=43 // pred_check_branch
          %308 = sbr.rel (%p306) target = $region48
        $region47: #{tpu_custom_call.1} parent=43 // pred_region
          %309 = dma.done %s302, 128
        $region48: #{tpu_custom_call.1} parent=43 // pred_fallthru
          _
        %s310 = sand.u32 %s28, 1
        %s311 = scalar_lea.sflag [#allocation6], %s310
        %s312 = sand.u32 %s62, 1
        %s313 = smul.addr %s312, 64
        %s314 = scalar_lea.vmem [#allocation5], %s313
        // Predicated region
        $region49: #{tpu_custom_call.1} parent=43 // pred_check
          %p315 = pneg %p75
        $region50: #{tpu_custom_call.1} parent=43 // pred_check_branch
          %317 = sbr.rel (%p315) target = $region52
        $region51: #{tpu_custom_call.1} parent=43 // pred_region
          %318 = dma.done %s311, 1024
        $region52: #{tpu_custom_call.1} parent=43 // pred_fallthru
          _
        // Predicated region
        $region53: #{tpu_custom_call.1} parent=43 // pred_check
          %p319 = pneg %p96
        $region54: #{tpu_custom_call.1} parent=43 // pred_check_branch
          %321 = sbr.rel (%p319) target = $region56
        $region55: #{tpu_custom_call.1} parent=43 // pred_region
          %322 = dma.done [#allocation6], 128
        $region56: #{tpu_custom_call.1} parent=43 // pred_fallthru
          _
        // Predicated region
        $region57: #{tpu_custom_call.1} parent=43 // pred_check
          %p323 = pneg %p117
        $region58: #{tpu_custom_call.1} parent=43 // pred_check_branch
          %325 = sbr.rel (%p323) target = $region60
        $region59: #{tpu_custom_call.1} parent=43 // pred_region
          %326 = dma.done [#allocation9], 16
        $region60: #{tpu_custom_call.1} parent=43 // pred_fallthru
          _
        // Predicated region
        $region61: #{tpu_custom_call.1} parent=43 // pred_check
          %p327 = pneg %p138
        $region62: #{tpu_custom_call.1} parent=43 // pred_check_branch
          %329 = sbr.rel (%p327) target = $region64
        $region63: #{tpu_custom_call.1} parent=43 // pred_region
          %330 = dma.done [#allocation9], 128
        $region64: #{tpu_custom_call.1} parent=43 // pred_fallthru
          _
        // Predicated region
        $region65: #{tpu_custom_call.1} parent=43 // pred_check
          %p331 = pneg %p159
        $region66: #{tpu_custom_call.1} parent=43 // pred_check_branch
          %333 = sbr.rel (%p331) target = $region68
        $region67: #{tpu_custom_call.1} parent=43 // pred_region
          %334 = dma.done [#allocation12], 16
        $region68: #{tpu_custom_call.1} parent=43 // pred_fallthru
          _
        %s335 = sand.u32 %s36, 1
        %s336 = scalar_lea.sflag [#allocation3], %s335
        %s337 = sand.u32 %s36, 1
        %s338 = smul.addr %s337, 8
        %s339 = scalar_lea.vmem [#allocation2], %s338
        %p340 = pneg %p49
        %p341 = pneg %p46
        %s342 = sand.u32 %s28, 1
        %s343 = scalar_lea.sflag [#allocation6], %s342
        %s344 = sand.u32 %s62, 1
        %s345 = smul.addr %s344, 64
        %s346 = scalar_lea.vmem [#allocation5], %s345
        %p347 = pneg %p75
        %p348 = pneg %p72
        %p349 = pneg %p96
        %p350 = pneg %p93
        %p351 = pneg %p117
        %p352 = pneg %p114
        %p353 = pneg %p138
        %p354 = pneg %p135
        %p355 = pneg %p159
        %p356 = pneg %p156
        %p357 = pneg %p185
        %p358 = pneg %p182
        %s359 = sand.u32 %s172, 1
        %s360 = scalar_lea.sflag [#allocation4], %s359
        %s361 = sand.u32 %s172, 1
        %s362 = smul.addr %s361, 16
        %s363 = scalar_lea.vmem [#allocation13], %s362
        %v365 = vld [vmem:[%s305] sm:$0xf]
        %v366 = vld [vmem:[%s305 + $0x4] sm:$0xf]
        %v367 = vld [vmem:[%s314] sm:$0xf]
        %v368 = vld [vmem:[%s314 + $0x4] sm:$0xf]
        %v369 = vld [vmem:[%s314 + $0x8] sm:$0xf]
        %v370 = vld [vmem:[%s314 + $0xc] sm:$0xf]
        %v371 = vld [vmem:[%s314 + $0x10] sm:$0xf]
        %v372 = vld [vmem:[%s314 + $0x14] sm:$0xf]
        %v373 = vld [vmem:[%s314 + $0x18] sm:$0xf]
        %v374 = vld [vmem:[%s314 + $0x1c] sm:$0xf]
        %v375 = vld [vmem:[%s314 + $0x20] sm:$0xf]
        %v376 = vld [vmem:[%s314 + $0x24] sm:$0xf]
        %v377 = vld [vmem:[%s314 + $0x28] sm:$0xf]
        %v378 = vld [vmem:[%s314 + $0x2c] sm:$0xf]
        %v379 = vld [vmem:[%s314 + $0x30] sm:$0xf]
        %v380 = vld [vmem:[%s314 + $0x34] sm:$0xf]
        %v381 = vld [vmem:[%s314 + $0x38] sm:$0xf]
        %v382 = vld [vmem:[%s314 + $0x3c] sm:$0xf]
        %v385 = vunpack.c.l.b16 %v365
        %v386 = vunpack.c.l.b16 %v366
        %v387 = vpack.c.b16 %v386, %v385
        %v405 = vunpack.c.l.b16 %v367
        %v406 = vunpack.c.l.b16 %v368
        %v407 = vunpack.c.l.b16 %v369
        %v408 = vunpack.c.l.b16 %v370
        %v409 = vunpack.c.l.b16 %v371
        %v410 = vunpack.c.l.b16 %v372
        %v411 = vunpack.c.l.b16 %v373
        %v412 = vunpack.c.l.b16 %v374
        %v413 = vunpack.c.l.b16 %v375
        %v414 = vunpack.c.l.b16 %v376
        %v415 = vunpack.c.l.b16 %v377
        %v416 = vunpack.c.l.b16 %v378
        %v417 = vunpack.c.l.b16 %v379
        %v418 = vunpack.c.l.b16 %v380
        %v419 = vunpack.c.l.b16 %v381
        %v420 = vunpack.c.l.b16 %v382
        %v421 = vpack.c.b16 %v406, %v405
        %v422 = vpack.c.b16 %v408, %v407
        %v423 = vpack.c.b16 %v410, %v409
        %v424 = vpack.c.b16 %v412, %v411
        %v425 = vpack.c.b16 %v414, %v413
        %v426 = vpack.c.b16 %v416, %v415
        %v427 = vpack.c.b16 %v418, %v417
        %v428 = vpack.c.b16 %v420, %v419
        %437 = vmatprep.subr.bf16.mxu0 0
        %438 = vmatpush1.bf16.msra.mxu0 %v421
        %439 = vmatprep.subr.bf16.mxu0 0
        %440 = vmatpush1.bf16.msra.mxu0 %v422
        %441 = vmatprep.subr.bf16.mxu0 0
        %442 = vmatpush1.bf16.msra.mxu0 %v423
        %443 = vmatprep.subr.bf16.mxu0 0
        %444 = vmatpush1.bf16.msra.mxu0 %v424
        %445 = vmatprep.subr.bf16.mxu0 0
        %446 = vmatpush1.bf16.msra.mxu0 %v425
        %447 = vmatprep.subr.bf16.mxu0 0
        %448 = vmatpush1.bf16.msra.mxu0 %v426
        %449 = vmatprep.subr.bf16.mxu0 0
        %450 = vmatpush1.bf16.msra.mxu0 %v427
        %451 = vmatprep.subr.bf16.mxu0 0
        %452 = vmatpush1.bf16.msra.mxu0 %v428
        %453 = vmatprep.subr.bf16.mxu0 0
        %454 = vmatpush1.bf16.msra.mxu0 0
        %455 = vmatprep.subr.bf16.mxu0 0
        %456 = vmatpush1.bf16.msra.mxu0 0
        %457 = vmatprep.subr.bf16.mxu0 0
        %458 = vmatpush1.bf16.msra.mxu0 0
        %459 = vmatprep.subr.bf16.mxu0 0
        %460 = vmatpush1.bf16.msra.mxu0 0
        %461 = vmatprep.subr.bf16.mxu0 0
        %462 = vmatpush1.bf16.msra.mxu0 0
        %463 = vmatprep.subr.bf16.mxu0 0
        %464 = vmatpush1.bf16.msra.mxu0 0
        %465 = vmatprep.subr.bf16.mxu0 0
        %466 = vmatpush1.bf16.msra.mxu0 0
        %467 = vmatprep.subr.bf16.mxu0 0
        %468 = vmatpush1.bf16.msra.mxu0 0
        %469 = vmatprep.mubr.bf16.mxu0 0
        %470 = vmatmul.mubr.bf16.gmra.mrb[0].mxu0 %v387
        %v471 = vpop.f32.mrb[0].mxu0
        %v472 = vadd.f32 0.0, %v471
        %v473 = vpop.f32.mrb[0].mxu0
        %v474 = vpop.f32.mrb[0].mxu0
        %v475 = vadd.f32 0.0, %v474
        %v476 = vpop.f32.mrb[0].mxu0
        %477 = vdwg.mxu0
        %v478 = vpack.c.bf16 %v475, %v472
        %v479 = vld [vmem:[#allocation7] sm:$0xf]
        %v480 = vld [vmem:[#allocation7 + $0x4] sm:$0xf]
        %v481 = vld [vmem:[#allocation8] sm:$0x1]
        %v483 = vlaneseq
        %v484 = vshrl.u32 %v483, 7
        %v485 = vsub.s32 0, %v484
        %v486 = vrot.slane %v481, %v485
        %v490 = vunpack.c.l.b16 %v479
        %v491 = vunpack.c.l.b16 %v480
        %v492 = vpack.c.b16 %v491, %v490
        %vm494 = vcmask 130048
        %v496 = vsel %vm494, %v478, 0
        %498 = vmatprep.subr.bf16.mxu0 0
        %499 = vmatpush1.bf16.msra.mxu0 %v492
        %500 = vmatprep.subr.bf16.mxu0 0
        %501 = vmatpush1.bf16.msra.mxu0 0
        %502 = vmatprep.subr.bf16.mxu0 0
        %503 = vmatpush1.bf16.msra.mxu0 0
        %504 = vmatprep.subr.bf16.mxu0 0
        %505 = vmatpush1.bf16.msra.mxu0 0
        %506 = vmatprep.subr.bf16.mxu0 0
        %507 = vmatpush1.bf16.msra.mxu0 0
        %508 = vmatprep.subr.bf16.mxu0 0
        %509 = vmatpush1.bf16.msra.mxu0 0
        %510 = vmatprep.subr.bf16.mxu0 0
        %511 = vmatpush1.bf16.msra.mxu0 0
        %512 = vmatprep.subr.bf16.mxu0 0
        %513 = vmatpush1.bf16.msra.mxu0 0
        %514 = vmatprep.subr.bf16.mxu0 0
        %515 = vmatpush1.bf16.msra.mxu0 0
        %516 = vmatprep.subr.bf16.mxu0 0
        %517 = vmatpush1.bf16.msra.mxu0 0
        %518 = vmatprep.subr.bf16.mxu0 0
        %519 = vmatpush1.bf16.msra.mxu0 0
        %520 = vmatprep.subr.bf16.mxu0 0
        %521 = vmatpush1.bf16.msra.mxu0 0
        %522 = vmatprep.subr.bf16.mxu0 0
        %523 = vmatpush1.bf16.msra.mxu0 0
        %524 = vmatprep.subr.bf16.mxu0 0
        %525 = vmatpush1.bf16.msra.mxu0 0
        %526 = vmatprep.subr.bf16.mxu0 0
        %527 = vmatpush1.bf16.msra.mxu0 0
        %528 = vmatprep.subr.bf16.mxu0 0
        %529 = vmatpush1.bf16.msra.mxu0 0
        %530 = vmatprep.mubr.bf16.mxu0 0
        %531 = vmatmul.mubr.bf16.gmra.mrb[0].mxu0 %v496
        %v532 = vpop.f32.mrb[0].mxu0
        %v533 = vadd.f32 %v486, %v532
        %v534 = vpop.f32.mrb[0].mxu0
        %v535 = vpop.f32.mrb[0].mxu0
        %v536 = vadd.f32 %v486, %v535
        %v537 = vpop.f32.mrb[0].mxu0
        %538 = vdwg.mxu0
        %v539 = vmax.f32 %v533, 0.0
        %v540 = vmax.f32 %v536, 0.0
        %v541 = vmul.f32 %v539, %v539
        %v542 = vmul.f32 %v540, %v540
        %v543 = vsel %vm494, %v541, 0.0
        %544 = vadd.xlane.f32.xlu0 %v543
        %v545 = vpop.xlane.xlu0 %544
        %v546 = vsel %vm494, %v542, 0.0
        %547 = vadd.xlane.f32.xlu0 %v546
        %v548 = vpop.xlane.xlu0 %547
        %v549 = vmax.f32 %v545, 1e-16
        %v550 = vmax.f32 %v548, 1e-16
        %v551 = vrsqrt.pop %v549
        %v552 = vrsqrt.pop %v550
        %v553 = vmul.f32 %v539, %v551
        %v554 = vmul.f32 %v540, %v552
        %v555 = vpack.c.bf16 %v554, %v553
        %v556 = vld [vmem:[#allocation10] sm:$0xf]
        %v557 = vld [vmem:[#allocation10 + $0x4] sm:$0xf]
        %558 = vxpose.xlu0.c.b16.start [1/8] %v555, 128
        %559 = vxpose.xlu0.c.b16.cont [2/8] 0, 128
        %560 = vxpose.xlu0.c.b16.cont [3/8] 0, 128
        %561 = vxpose.xlu0.c.b16.cont [4/8] 0, 128
        %562 = vxpose.xlu0.c.b16.cont [5/8] 0, 128
        %563 = vxpose.xlu0.c.b16.cont [6/8] 0, 128
        %564 = vxpose.xlu0.c.b16.cont [7/8] 0, 128
        %565 = vxpose.xlu0.c.b16.end [8/8] 0, 128
        %v566 = vpop.trf.xlu0
        %v567 = vpop.trf.xlu0
        %v568 = vpop.trf.xlu0
        %v569 = vpop.trf.xlu0
        %v570 = vpop.trf.xlu0
        %v571 = vpop.trf.xlu0
        %v572 = vpop.trf.xlu0
        %v573 = vpop.trf.xlu0
        %v576 = vunpack.c.l.b16 %v556
        %v577 = vunpack.c.l.b16 %v557
        %v578 = vpack.c.b16 %v577, %v576
        %v581 = vsel %vm494, %v566, 0
        %583 = vmatprep.subr.bf16.mxu0 0
        %584 = vmatpush1.bf16.msra.mxu0 %v578
        %585 = vmatprep.subr.bf16.mxu0 0
        %586 = vmatpush1.bf16.msra.mxu0 0
        %587 = vmatprep.subr.bf16.mxu0 0
        %588 = vmatpush1.bf16.msra.mxu0 0
        %589 = vmatprep.subr.bf16.mxu0 0
        %590 = vmatpush1.bf16.msra.mxu0 0
        %591 = vmatprep.subr.bf16.mxu0 0
        %592 = vmatpush1.bf16.msra.mxu0 0
        %593 = vmatprep.subr.bf16.mxu0 0
        %594 = vmatpush1.bf16.msra.mxu0 0
        %595 = vmatprep.subr.bf16.mxu0 0
        %596 = vmatpush1.bf16.msra.mxu0 0
        %597 = vmatprep.subr.bf16.mxu0 0
        %598 = vmatpush1.bf16.msra.mxu0 0
        %599 = vmatprep.subr.bf16.mxu0 0
        %600 = vmatpush1.bf16.msra.mxu0 0
        %601 = vmatprep.subr.bf16.mxu0 0
        %602 = vmatpush1.bf16.msra.mxu0 0
        %603 = vmatprep.subr.bf16.mxu0 0
        %604 = vmatpush1.bf16.msra.mxu0 0
        %605 = vmatprep.subr.bf16.mxu0 0
        %606 = vmatpush1.bf16.msra.mxu0 0
        %607 = vmatprep.subr.bf16.mxu0 0
        %608 = vmatpush1.bf16.msra.mxu0 0
        %609 = vmatprep.subr.bf16.mxu0 0
        %610 = vmatpush1.bf16.msra.mxu0 0
        %611 = vmatprep.subr.bf16.mxu0 0
        %612 = vmatpush1.bf16.msra.mxu0 0
        %613 = vmatprep.subr.bf16.mxu0 0
        %614 = vmatpush1.bf16.msra.mxu0 0
        %615 = vmatprep.mubr.bf16.mxu0 0
        %616 = vmatmul.mubr.bf16.gmra.mrb[0].mxu0 %v581
        %v617 = vpop.f32.mrb[0].mxu0
        %v618 = vadd.f32 0.0, %v617
        %v619 = vpop.f32.mrb[0].mxu0
        %v620 = vpop.f32.mrb[0].mxu0
        %v621 = vadd.f32 0.0, %v620
        %v622 = vpop.f32.mrb[0].mxu0
        %623 = vdwg.mxu0
        %v624 = vpack.c.bf16 %v621, %v618
        %v625 = vld [vmem:[#allocation11] sm:$0x1]
        %v627 = vlaneseq
        %v628 = vshrl.u32 %v627, 7
        %v629 = vsub.s32 0, %v628
        %v630 = vrot.slane %v625, %v629
        %v633 = vsel %vm494, %v555, 0
        %635 = vmatprep.subr.bf16.mxu0 0
        %636 = vmatpush1.bf16.msra.mxu0 %v624
        %637 = vmatprep.subr.bf16.mxu0 0
        %638 = vmatpush1.bf16.msra.mxu0 0
        %639 = vmatprep.subr.bf16.mxu0 0
        %640 = vmatpush1.bf16.msra.mxu0 0
        %641 = vmatprep.subr.bf16.mxu0 0
        %642 = vmatpush1.bf16.msra.mxu0 0
        %643 = vmatprep.subr.bf16.mxu0 0
        %644 = vmatpush1.bf16.msra.mxu0 0
        %645 = vmatprep.subr.bf16.mxu0 0
        %646 = vmatpush1.bf16.msra.mxu0 0
        %647 = vmatprep.subr.bf16.mxu0 0
        %648 = vmatpush1.bf16.msra.mxu0 0
        %649 = vmatprep.subr.bf16.mxu0 0
        %650 = vmatpush1.bf16.msra.mxu0 0
        %651 = vmatprep.subr.bf16.mxu0 0
        %652 = vmatpush1.bf16.msra.mxu0 0
        %653 = vmatprep.subr.bf16.mxu0 0
        %654 = vmatpush1.bf16.msra.mxu0 0
        %655 = vmatprep.subr.bf16.mxu0 0
        %656 = vmatpush1.bf16.msra.mxu0 0
        %657 = vmatprep.subr.bf16.mxu0 0
        %658 = vmatpush1.bf16.msra.mxu0 0
        %659 = vmatprep.subr.bf16.mxu0 0
        %660 = vmatpush1.bf16.msra.mxu0 0
        %661 = vmatprep.subr.bf16.mxu0 0
        %662 = vmatpush1.bf16.msra.mxu0 0
        %663 = vmatprep.subr.bf16.mxu0 0
        %664 = vmatpush1.bf16.msra.mxu0 0
        %665 = vmatprep.subr.bf16.mxu0 0
        %666 = vmatpush1.bf16.msra.mxu0 0
        %667 = vmatprep.mubr.bf16.mxu0 0
        %668 = vmatmul.mubr.bf16.gmra.mrb[0].mxu0 %v633
        %v669 = vpop.f32.mrb[0].mxu0
        %v670 = vadd.f32 %v630, %v669
        %v671 = vpop.f32.mrb[0].mxu0
        %v672 = vpop.f32.mrb[0].mxu0
        %v673 = vadd.f32 %v630, %v672
        %v674 = vpop.f32.mrb[0].mxu0
        %675 = vdwg.mxu0
        %v676 = vsub.f32 0.0, %v670
        %v677 = vsub.f32 0.0, %v673
        %v678 = vmul.f32 %v676, 1.442695
        %v679 = vpow.pop %v678
        %v680 = vmul.f32 %v677, 1.442695
        %v681 = vpow.pop %v680
        %v682 = vadd.f32 %v679, 1.0
        %v683 = vadd.f32 %v681, 1.0
        %v684 = vrcp.pop %v682
        %v685 = vrcp.pop %v683
        %686 = vst [vmem:[%s363] sm:$0xff] %v684
        %687 = vst [vmem:[%s363 + $0x8] sm:$0xff] %v685
        %s688 = sand.u32 %s172, 1
        %s689 = scalar_lea.sflag [#allocation4], %s688
        %s690 = sand.u32 %s172, 1
        %s691 = smul.addr %s690, 16
        %s692 = scalar_lea.vmem [#allocation13], %s691
        // Predicated region
        $region69: #{tpu_custom_call.1} parent=43 // pred_check
          %p693 = pneg %p182
        $region70: #{tpu_custom_call.1} parent=43 // pred_check_branch
          %695 = sbr.rel (%p693) target = $region72
        $region71: #{tpu_custom_call.1} parent=43 // pred_region
          %s697 = ssub.s32 256, 256
          %698 = vsyncadd %s689, %s697
          %s699 = smul.addr %s28, 2
          %s700 = smul.addr %s699, 128
          %s701 = scalar_lea.hbm %s6, %s700
          %s702 = sshll.u32 %s692, 4
          %s703 = int_to_ptr.vmem [resolvable:$true] %s702
          %708 = dma.vmem_to_hbm [thread:$0]  %s703, 256, %s701, %s689, 128, 128, 8
        $region72: #{tpu_custom_call.1} parent=43 // pred_fallthru
          _
      $region44: #{tpu_custom_call.1} parent=5 // pred_fallthru
        _
      %p709 = scmp.le.s32.totalorder 2, %s23
      // Predicated region
      $region73: #{tpu_custom_call.1} parent=5 // pred_check
        %p710 = pneg %p709
      $region74: #{tpu_custom_call.1} parent=5 // pred_check_branch
        %712 = sbr.rel (%p710) target = $region76
      $region75: #{tpu_custom_call.1} parent=5 // pred_region
        %s713 = ssub.s32 %s23, 2
        // Predicated region
        $region77: #{tpu_custom_call.1} parent=75 // pred_check
          %p714 = pneg %p188
        $region78: #{tpu_custom_call.1} parent=75 // pred_check_branch
          %716 = sbr.rel (%p714) target = $region80
        $region79: #{tpu_custom_call.1} parent=75 // pred_region
          %s717 = sand.u32 %s173, 1
          %s718 = scalar_lea.sflag [#allocation4], %s717
          %s719 = sand.u32 %s173, 1
          %s720 = smul.addr %s719, 16
          %s721 = scalar_lea.vmem [#allocation13], %s720
          %722 = dma.done %s718, 256
        $region80: #{tpu_custom_call.1} parent=75 // pred_fallthru
          _
      $region76: #{tpu_custom_call.1} parent=5 // pred_fallthru
        _
    $region6: #{tpu_custom_call.1} parent=1 // loop_footer
      %s27 = sadd.s32 1, %s23
    $region7: #{tpu_custom_call.1} parent=1 // loop_footer_branch
      %22 = sbr.rel target = $region3
    $region8: #{tpu_custom_call.1} parent=1 // loop_exit
      _
    %723 = vsyncpa [#allocation3], 1
    %s724 = scalar_lea.sflag [#allocation3], 1
    %725 = vsyncpa %s724, 1
    %726 = vsyncpa [#allocation6], 1
    %s727 = scalar_lea.sflag [#allocation6], 1
    %728 = vsyncpa %s727, 1
    %729 = vsyncpa [#allocation9], 1
    %730 = vsyncpa [#allocation12], 1
    %731 = vsyncpa [#allocation4], 1
    %s732 = scalar_lea.sflag [#allocation4], 1
    %733 = vsyncpa %s732, 1

</llo_original>
